<compile_context>
chip_gen: v7x
topology: tpu7x:2x2x1
jax: 0.10.0
libtpu: 0.0.40
codegen_flags: <defaults>
</compile_context>

<pallas_src>
import jax
import jax.numpy as jnp
from jax.experimental import pallas as pl
from jax.experimental.pallas import tpu as pltpu


def _round_up(x, m):
    return ((x + m - 1) // m) * m


# ---------------------------------------------------------------------------
# Pallas kernel: one (row-tile i, reduction-tile k) step of out = A_hat @ XW
# Output block is VMEM-resident across k (index_map ignores k), so we
# accumulate directly into it in f32 -- no scratch accumulator needed.
# ---------------------------------------------------------------------------
def _gcn_agg_kernel(adj_ref, xw_ref, o_ref):
    k = pl.program_id(1)

    @pl.when(k == 0)
    def _():
        o_ref[...] = jnp.zeros_like(o_ref)

    # bf16 x bf16 -> f32 accumulation on the MXU.
    o_ref[...] += jnp.dot(
        adj_ref[...], xw_ref[...], preferred_element_type=jnp.float32
    )


def _pick_tiles(n, tm=512, tk=2048):
    """Pick (tm, tk, nr, nc). All multiples of 128; nr%tm==0, nc%tk==0.

    Keeps >= 2 row tiles when the (padded) graph allows it so the 'parallel'
    row axis can shard across v7x's two TensorCores.
    """
    n128 = _round_up(n, 128)
    tm = min(tm, n128)
    if n128 < 2 * tm and n128 >= 256:
        tm = min(tm, _round_up(n128 // 2, 128))
    tk = min(tk, n128)
    nr = _round_up(n128, tm)
    nc = _round_up(n128, tk)
    return tm, tk, nr, nc


def gcn_aggregate_pallas(adj_p, xw_p, *, tm, tk):
    """adj_p: [nr, nc] bf16 (zero-padded), xw_p: [nc, Hp] bf16 -> [nr, Hp] f32."""
    nr, nc = adj_p.shape
    hp = xw_p.shape[1]
    assert nr % tm == 0 and nc % tk == 0 and hp % 128 == 0

    # VMEM budget: double-buffered A tile + resident XW + resident out tile.
    a_bytes = 2 * tm * tk * 2
    xw_bytes = 2 * nc * hp * 2
    o_bytes = 2 * tm * hp * 4
    vmem_limit = int(min(max(1.25 * (a_bytes + xw_bytes + o_bytes) + (4 << 20),
                             32 << 20), 100 << 20))

    return pl.pallas_call(
        _gcn_agg_kernel,
        out_shape=jax.ShapeDtypeStruct((nr, hp), jnp.float32),
        grid_spec=pltpu.PrefetchScalarGridSpec(
            num_scalar_prefetch=0,
            grid=(nr // tm, nc // tk),
            in_specs=[
                # A_hat streams through (tm, tk) double-buffered tiles.
                pl.BlockSpec((tm, tk), lambda i, k: (i, k)),
                # XW is fully VMEM-resident (same block every step -> no refetch).
                pl.BlockSpec((nc, hp), lambda i, k: (0, 0)),
            ],
            out_specs=pl.BlockSpec((tm, hp), lambda i, k: (i, 0)),
        ),
        compiler_params=pltpu.CompilerParams(
            # rows independent -> shard across v7x's 2 TCs; reduction axis stays
            # sequential (output block is the accumulator across k).
            dimension_semantics=("parallel", "arbitrary"),
            vmem_limit_bytes=vmem_limit,
        ),
    )(adj_p, xw_p)


# ---------------------------------------------------------------------------
# Glue: padded, normalized adjacency built directly at (nr, nc) in bf16.
# Matches torch_geometric gcn_norm with add_remaining_self_loops (existing
# self-loops are kept, missing ones get weight 1).
# ---------------------------------------------------------------------------
# TODO(synk): for genuinely sparse graphs, replace the dense A_hat @ XW stream
# with a scalar-prefetch gather kernel over CSR row blocks instead of
# materializing / streaming the N x N matrix.
def build_normalized_adjacency_padded(edge_index, num_nodes, nr, nc,
                                      dtype=jnp.bfloat16):
    src = edge_index[0]
    tgt = edge_index[1]
    ones = jnp.ones(src.shape, jnp.float32)

    # incoming-edge degree (message flows source -> target)
    deg = jnp.zeros((num_nodes,), jnp.float32).at[tgt].add(ones)
    # self-loop presence per node
    has_self = jnp.zeros((num_nodes,), jnp.float32).at[tgt].add(
        jnp.where(src == tgt, 1.0, 0.0)
    )
    # add_remaining_self_loops: weight-1 self loop only where missing
    deg = deg + jnp.where(has_self > 0, 0.0, 1.0)
    dinv = jnp.where(deg > 0, 1.0 / jnp.sqrt(deg), 0.0)

    # scatter normalized edge weights straight into the padded matrix
    a = jnp.zeros((nr, nc), jnp.float32)
    a = a.at[tgt, src].add(dinv[tgt] * dinv[src])
    idx = jnp.arange(num_nodes)
    a = a.at[idx, idx].add(jnp.where(has_self > 0, 0.0, dinv * dinv))
    return a.astype(dtype)


def build_normalized_adjacency_dense(edge_index, num_nodes):
    """f32 reference builder (same add_remaining_self_loops semantics)."""
    src = edge_index[0]
    tgt = edge_index[1]
    a = jnp.zeros((num_nodes, num_nodes), jnp.float32).at[tgt, src].add(1.0)
    idx = jnp.arange(num_nodes)
    diag = jnp.diagonal(a)
    a = a.at[idx, idx].set(jnp.where(diag > 0, diag, 1.0))
    deg = a.sum(axis=1)
    dinv = jnp.where(deg > 0, 1.0 / jnp.sqrt(deg), 0.0)
    return dinv[:, None] * a * dinv[None, :]


# ---------------------------------------------------------------------------
# Module wrapper (mirrors GCN.forward(edge_index, x))
# ---------------------------------------------------------------------------
class GCNPallas:
    def __init__(self, nfeat, nhid, key):
        k_w, _ = jax.random.split(key)
        # glorot init (as in GCNConv's Linear), deterministic from key
        limit = jnp.sqrt(6.0 / (nfeat + nhid))
        self.w = jax.random.uniform(
            k_w, (nfeat, nhid), minval=-limit, maxval=limit, dtype=jnp.float32
        )
        # GCNConv bias is zero-initialized
        self.b = jnp.zeros((nhid,), jnp.float32)
        self.nhid = nhid
        self.h_pad = _round_up(nhid, 128)  # lane-dense output last dim

    def __call__(self, edge_index, x):
        n = x.shape[0]
        tm, tk, nr, nc = _pick_tiles(n)

        # padded bf16 A_hat, built once directly at the padded shape
        adj_p = build_normalized_adjacency_padded(edge_index, n, nr, nc)

        # hoisted X @ W in f32 (cheap), cast + padded once
        xw = jnp.dot(x, self.w, preferred_element_type=jnp.float32)
        xw_p = (
            jnp.zeros((nc, self.h_pad), jnp.bfloat16)
            .at[:n, : self.nhid]
            .set(xw.astype(jnp.bfloat16))
        )

        out = gcn_aggregate_pallas(adj_p, xw_p, tm=tm, tk=tk)
        # single fused epilogue: un-pad + bias add
        return out[:n, : self.nhid] + self.b


# ---------------------------------------------------------------------------
# Pure-JAX references for sanity checks
# ---------------------------------------------------------------------------
def gcn_reference_f32(edge_index, x, w, b):
    adj_hat = build_normalized_adjacency_dense(edge_index, x.shape[0])
    return adj_hat @ (x @ w) + b


def gcn_reference_bf16_operands(edge_index, x, w, b):
    # Same bf16 quantization of the streamed operands as the kernel uses,
    # with f32 accumulation -> tight comparison target.
    adj_hat = build_normalized_adjacency_dense(edge_index, x.shape[0]).astype(
        jnp.bfloat16
    )
    xw = jnp.dot(x, w, preferred_element_type=jnp.float32).astype(jnp.bfloat16)
    return (
        jnp.dot(
            adj_hat.astype(jnp.float32),
            xw.astype(jnp.float32),
            preferred_element_type=jnp.float32,
        )
        + b
    )


if __name__ == "__main__":
    key = jax.random.PRNGKey(0)
    k_x, k_e, k_p = jax.random.split(key, 3)

    num_nodes = 16
    nfeat = 16
    nhid = 32

    # deterministic node features
    x = jax.random.normal(k_x, (num_nodes, nfeat), dtype=jnp.float32)

    # deterministic edge_index [2, E]: a ring graph (both directions)
    src_ring = jnp.arange(num_nodes, dtype=jnp.int32)
    tgt_ring = (src_ring + 1) % num_nodes
    edge_index = jnp.stack(
        [
            jnp.concatenate([src_ring, tgt_ring]),
            jnp.concatenate([tgt_ring, src_ring]),
        ],
        axis=0,
    )  # shape [2, 32]

    model = GCNPallas(nfeat, nhid, k_p)

    out = model(edge_index, x)
    out = jax.block_until_ready(out)
    assert out.shape == (num_nodes, nhid)

    # Tight check against a reference using the same bf16-quantized operands.
    ref_q = gcn_reference_bf16_operands(edge_index, x, model.w, model.b)
    assert jnp.allclose(out, ref_q, atol=1e-3, rtol=1e-3)

    # Looser check against the full-f32 reference (bf16 stream quantization).
    ref_f32 = gcn_reference_f32(edge_index, x, model.w, model.b)
    assert jnp.allclose(out, ref_f32, atol=5e-2, rtol=5e-2)

    print("KERNEL_OK")
</pallas_src>

<mosaic_0001>
module attributes {stable_mosaic.version = 11 : i64} {
  func.func @_gcn_agg_kernel(%arg0: i32, %arg1: i32, %arg2: memref<128x128xbf16, #tpu.memory_space<vmem>>, %arg3: memref<128x128xbf16, #tpu.memory_space<vmem>>, %arg4: memref<128x128xf32, #tpu.memory_space<vmem>>) attributes {dimension_semantics = [#tpu.dimension_semantics<parallel>, #tpu.dimension_semantics<arbitrary>], iteration_bounds = array<i64: 1, 1>, scalar_prefetch = 0 : i64, scratch_operands = 0 : i64, tpu.core_type = #tpu.core_type<tc>, window_params = [{transform_indices = @transform_0, window_bounds = array<i64: 128, 128>}, {pipeline_mode = #tpu.pipeline_mode<synchronous>, transform_indices = @transform_1, window_bounds = array<i64: 128, 128>}, {transform_indices = @transform_2, window_bounds = array<i64: 128, 128>}]} {
    %c0_i32 = arith.constant 0 : i32
    %0 = arith.cmpi eq, %arg1, %c0_i32 : i32
    %1 = arith.extui %0 : i1 to i32
    %c0_i32_0 = arith.constant 0 : i32
    %2 = arith.cmpi ne, %1, %c0_i32_0 : i32
    scf.if %2 {
      %cst_8 = arith.constant 0.000000e+00 : f32
      %9 = vector.broadcast %cst_8 : f32 to vector<128x128xf32>
      %c0_9 = arith.constant 0 : index
      %c0_10 = arith.constant 0 : index
      %10 = vector.load %arg4[%c0_9, %c0_10] : memref<128x128xf32, #tpu.memory_space<vmem>>, vector<128x128xf32>
      tpu.vector_store %arg4[%c0_9, %c0_10], %9 {strides = array<i32>} : memref<128x128xf32, #tpu.memory_space<vmem>>, vector<128x128xf32>,
    } else {
    }
    %c0 = arith.constant 0 : index
    %c0_1 = arith.constant 0 : index
    %3 = vector.load %arg4[%c0, %c0_1] : memref<128x128xf32, #tpu.memory_space<vmem>>, vector<128x128xf32>
    %c0_2 = arith.constant 0 : index
    %c0_3 = arith.constant 0 : index
    %4 = vector.load %arg2[%c0_2, %c0_3] : memref<128x128xbf16, #tpu.memory_space<vmem>>, vector<128x128xbf16>
    %c0_4 = arith.constant 0 : index
    %c0_5 = arith.constant 0 : index
    %5 = vector.load %arg3[%c0_4, %c0_5] : memref<128x128xbf16, #tpu.memory_space<vmem>>, vector<128x128xbf16>
    %cst = arith.constant dense<0.000000e+00> : vector<128x128xf32>
    %6 = tpu.matmul %4, %5, %cst {dimension_numbers = #tpu.dot_dimension_numbers<[1], [0], [0], [1], [0, 0, 1, 1], [], []>} : vector<128x128xbf16>, vector<128x128xbf16>, vector<128x128xf32> -> vector<128x128xf32>
    %7 = arith.addf %3, %6 : vector<128x128xf32>
    %c0_6 = arith.constant 0 : index
    %c0_7 = arith.constant 0 : index
    %8 = vector.load %arg4[%c0_6, %c0_7] : memref<128x128xf32, #tpu.memory_space<vmem>>, vector<128x128xf32>
    tpu.vector_store %arg4[%c0_6, %c0_7], %7 {strides = array<i32>} : memref<128x128xf32, #tpu.memory_space<vmem>>, vector<128x128xf32>,
    return
  }
  func.func @transform_0(%arg0: i32, %arg1: i32) -> (i32, i32) {
    %c0_i32 = arith.constant 0 : i32
    return %arg0, %arg1 : i32, i32
  }
  func.func @transform_1(%arg0: i32, %arg1: i32) -> (i32, i32) {
    %c0_i32 = arith.constant 0 : i32
    %c0_i32_0 = arith.constant 0 : i32
    %c0_i32_1 = arith.constant 0 : i32
    return %c0_i32, %c0_i32_0 : i32, i32
  }
  func.func @transform_2(%arg0: i32, %arg1: i32) -> (i32, i32) {
    %c0_i32 = arith.constant 0 : i32
    %c0_i32_0 = arith.constant 0 : i32
    return %arg0, %c0_i32 : i32, i32
  }
}

</mosaic_0001>

<llo_original>
// kernel: tpu_custom_call.1
$region0: #{tpu_custom_call.1}
  #allocation0 [shape = 'u32[]', space=smem, size = 0x4, offset = 0x4, fixed_abs, tag = 'smem constant byte address 0x4 - core index']
  #allocation1 [shape = 'u32[144,128]{1,0:T(1,128)}', space=vmem, size = 0x12000, scoped, tag = 'internal scratch']
  %s0 = inlined_call_operand.hbm [shape: bf16[128,128], index: 0, kind: input, shape index: {}]
  %s1 = inlined_call_operand.hbm [shape: bf16[128,128], index: 1, kind: input, shape index: {}]
  %s2 = inlined_call_operand.hbm [shape: f32[128,128], index: 2, kind: output, shape index: {}]
  %s3 = sld [smem:[#allocation0]]
  $region30: #{tpu_custom_call.1} parent=0
    _
  %s5 = ssub.s32 1, %s3
  %s6 = scalar_select 0, %s5, %s3
  $region1: #{tpu_custom_call.1} parent=0
    #allocation2 [shape = 'u8[32768]{0}', space=vmem, size = 0x8000, scoped, tag = 'input window, operand 0, single buffered']
    #allocation3 [shape = 's32[1]{0}', space=sflag, size = 0x4, scoped, tag = 'scoped memory for tpu_custom_call.1']
    #allocation4 [shape = 's32[1]{0}', space=sflag, size = 0x4, scoped, tag = 'scoped memory for tpu_custom_call.1']
    #allocation5 [shape = 'u8[32768]{0}', space=vmem, size = 0x8000, scoped, tag = 'input window, operand 1, single buffered']
    #allocation6 [shape = 's32[1]{0}', space=sflag, size = 0x4, scoped, tag = 'scoped memory for tpu_custom_call.1']
    #allocation7 [shape = 'u8[65536]{0}', space=vmem, size = 0x10000, scoped, tag = 'output window, operand 0, single buffered']
    %7 = vsyncpa [#allocation3], 0
    %8 = vsyncpa [#allocation6], 0
    %9 = vsyncpa [#allocation4], 0
    // Predicated region
    $region2: #{tpu_custom_call.1} parent=1 // pred_check
      _
    $region3: #{tpu_custom_call.1} parent=1 // pred_check_branch
      %11 = sbr.rel (0) target = $region5
    $region4: #{tpu_custom_call.1} parent=1 // pred_region
      %s13 = ssub.s32 1024, 1024
      %14 = vsyncadd [#allocation3], %s13
      %s15 = sshll.u32 [#allocation2], 4
      %s16 = int_to_ptr.vmem [resolvable:$true] %s15
      %21 = dma.hbm_to_vmem [thread:$0]  %s0, 1024, %s16, [#allocation3], 64, 64, 4
    $region5: #{tpu_custom_call.1} parent=1 // pred_fallthru
      _
    // Predicated region
    $region6: #{tpu_custom_call.1} parent=1 // pred_check
      _
    $region7: #{tpu_custom_call.1} parent=1 // pred_check_branch
      %23 = sbr.rel (0) target = $region9
    $region8: #{tpu_custom_call.1} parent=1 // pred_region
      %s25 = ssub.s32 1024, 1024
      %26 = vsyncadd [#allocation6], %s25
      %s27 = sshll.u32 [#allocation5], 4
      %s28 = int_to_ptr.vmem [resolvable:$true] %s27
      %33 = dma.hbm_to_vmem [thread:$0]  %s1, 1024, %s28, [#allocation6], 64, 64, 4
    $region9: #{tpu_custom_call.1} parent=1 // pred_fallthru
      _
    // Predicated region
    $region10: #{tpu_custom_call.1} parent=1 // pred_check
      _
    $region11: #{tpu_custom_call.1} parent=1 // pred_check_branch
      %35 = sbr.rel (0) target = $region13
    $region12: #{tpu_custom_call.1} parent=1 // pred_region
      %36 = dma.done [#allocation3], 1024
    $region13: #{tpu_custom_call.1} parent=1 // pred_fallthru
      _
    // Predicated region
    $region14: #{tpu_custom_call.1} parent=1 // pred_check
      _
    $region15: #{tpu_custom_call.1} parent=1 // pred_check_branch
      %38 = sbr.rel (0) target = $region17
    $region16: #{tpu_custom_call.1} parent=1 // pred_region
      %39 = dma.done [#allocation6], 1024
    $region17: #{tpu_custom_call.1} parent=1 // pred_fallthru
      _
    %p41 = scmp.eq.s32.totalorder 0, 0
    // Predicated region
    $region18: #{tpu_custom_call.1} parent=1 // pred_check
      %p42 = pneg %p41
    $region19: #{tpu_custom_call.1} parent=1 // pred_check_branch
      %44 = sbr.rel (%p42) target = $region21
    $region20: #{tpu_custom_call.1} parent=1 // pred_region
      %45 = vst [vmem:[#allocation7] sm:$0xff] 0.0
      %46 = vst [vmem:[#allocation7 + $0x8] sm:$0xff] 0.0
      %47 = vst [vmem:[#allocation7 + $0x10] sm:$0xff] 0.0
      %48 = vst [vmem:[#allocation7 + $0x18] sm:$0xff] 0.0
      %49 = vst [vmem:[#allocation7 + $0x20] sm:$0xff] 0.0
      %50 = vst [vmem:[#allocation7 + $0x28] sm:$0xff] 0.0
      %51 = vst [vmem:[#allocation7 + $0x30] sm:$0xff] 0.0
      %52 = vst [vmem:[#allocation7 + $0x38] sm:$0xff] 0.0
      %53 = vst [vmem:[#allocation7 + $0x40] sm:$0xff] 0.0
      %54 = vst [vmem:[#allocation7 + $0x48] sm:$0xff] 0.0
      %55 = vst [vmem:[#allocation7 + $0x50] sm:$0xff] 0.0
      %56 = vst [vmem:[#allocation7 + $0x58] sm:$0xff] 0.0
      %57 = vst [vmem:[#allocation7 + $0x60] sm:$0xff] 0.0
      %58 = vst [vmem:[#allocation7 + $0x68] sm:$0xff] 0.0
      %59 = vst [vmem:[#allocation7 + $0x70] sm:$0xff] 0.0
      %60 = vst [vmem:[#allocation7 + $0x78] sm:$0xff] 0.0
    $region21: #{tpu_custom_call.1} parent=1 // pred_fallthru
      _
    %v61 = vld [vmem:[#allocation7] sm:$0xff]
    %v62 = vld [vmem:[#allocation7 + $0x8] sm:$0xff]
    %v63 = vld [vmem:[#allocation7 + $0x10] sm:$0xff]
    %v64 = vld [vmem:[#allocation7 + $0x18] sm:$0xff]
    %v65 = vld [vmem:[#allocation7 + $0x20] sm:$0xff]
    %v66 = vld [vmem:[#allocation7 + $0x28] sm:$0xff]
    %v67 = vld [vmem:[#allocation7 + $0x30] sm:$0xff]
    %v68 = vld [vmem:[#allocation7 + $0x38] sm:$0xff]
    %v69 = vld [vmem:[#allocation7 + $0x40] sm:$0xff]
    %v70 = vld [vmem:[#allocation7 + $0x48] sm:$0xff]
    %v71 = vld [vmem:[#allocation7 + $0x50] sm:$0xff]
    %v72 = vld [vmem:[#allocation7 + $0x58] sm:$0xff]
    %v73 = vld [vmem:[#allocation7 + $0x60] sm:$0xff]
    %v74 = vld [vmem:[#allocation7 + $0x68] sm:$0xff]
    %v75 = vld [vmem:[#allocation7 + $0x70] sm:$0xff]
    %v76 = vld [vmem:[#allocation7 + $0x78] sm:$0xff]
    %v77 = vld [vmem:[#allocation2] sm:$0xf]
    %v78 = vld [vmem:[#allocation2 + $0x4] sm:$0xf]
    %v79 = vld [vmem:[#allocation2 + $0x8] sm:$0xf]
    %v80 = vld [vmem:[#allocation2 + $0xc] sm:$0xf]
    %v81 = vld [vmem:[#allocation2 + $0x10] sm:$0xf]
    %v82 = vld [vmem:[#allocation2 + $0x14] sm:$0xf]
    %v83 = vld [vmem:[#allocation2 + $0x18] sm:$0xf]
    %v84 = vld [vmem:[#allocation2 + $0x1c] sm:$0xf]
    %v85 = vld [vmem:[#allocation2 + $0x20] sm:$0xf]
    %v86 = vld [vmem:[#allocation2 + $0x24] sm:$0xf]
    %v87 = vld [vmem:[#allocation2 + $0x28] sm:$0xf]
    %v88 = vld [vmem:[#allocation2 + $0x2c] sm:$0xf]
    %v89 = vld [vmem:[#allocation2 + $0x30] sm:$0xf]
    %v90 = vld [vmem:[#allocation2 + $0x34] sm:$0xf]
    %v91 = vld [vmem:[#allocation2 + $0x38] sm:$0xf]
    %v92 = vld [vmem:[#allocation2 + $0x3c] sm:$0xf]
    %v93 = vld [vmem:[#allocation5] sm:$0xf]
    %v94 = vld [vmem:[#allocation5 + $0x4] sm:$0xf]
    %v95 = vld [vmem:[#allocation5 + $0x8] sm:$0xf]
    %v96 = vld [vmem:[#allocation5 + $0xc] sm:$0xf]
    %v97 = vld [vmem:[#allocation5 + $0x10] sm:$0xf]
    %v98 = vld [vmem:[#allocation5 + $0x14] sm:$0xf]
    %v99 = vld [vmem:[#allocation5 + $0x18] sm:$0xf]
    %v100 = vld [vmem:[#allocation5 + $0x1c] sm:$0xf]
    %v101 = vld [vmem:[#allocation5 + $0x20] sm:$0xf]
    %v102 = vld [vmem:[#allocation5 + $0x24] sm:$0xf]
    %v103 = vld [vmem:[#allocation5 + $0x28] sm:$0xf]
    %v104 = vld [vmem:[#allocation5 + $0x2c] sm:$0xf]
    %v105 = vld [vmem:[#allocation5 + $0x30] sm:$0xf]
    %v106 = vld [vmem:[#allocation5 + $0x34] sm:$0xf]
    %v107 = vld [vmem:[#allocation5 + $0x38] sm:$0xf]
    %v108 = vld [vmem:[#allocation5 + $0x3c] sm:$0xf]
    %v125 = vunpack.c.l.b16 %v77
    %v126 = vunpack.c.l.b16 %v78
    %v127 = vunpack.c.l.b16 %v79
    %v128 = vunpack.c.l.b16 %v80
    %v129 = vunpack.c.l.b16 %v81
    %v130 = vunpack.c.l.b16 %v82
    %v131 = vunpack.c.l.b16 %v83
    %v132 = vunpack.c.l.b16 %v84
    %v133 = vunpack.c.l.b16 %v85
    %v134 = vunpack.c.l.b16 %v86
    %v135 = vunpack.c.l.b16 %v87
    %v136 = vunpack.c.l.b16 %v88
    %v137 = vunpack.c.l.b16 %v89
    %v138 = vunpack.c.l.b16 %v90
    %v139 = vunpack.c.l.b16 %v91
    %v140 = vunpack.c.l.b16 %v92
    %v141 = vpack.c.b16 %v126, %v125
    %v142 = vpack.c.b16 %v128, %v127
    %v143 = vpack.c.b16 %v130, %v129
    %v144 = vpack.c.b16 %v132, %v131
    %v145 = vpack.c.b16 %v134, %v133
    %v146 = vpack.c.b16 %v136, %v135
    %v147 = vpack.c.b16 %v138, %v137
    %v148 = vpack.c.b16 %v140, %v139
    %v173 = vunpack.c.l.b16 %v93
    %v174 = vunpack.c.l.b16 %v94
    %v175 = vunpack.c.l.b16 %v95
    %v176 = vunpack.c.l.b16 %v96
    %v177 = vunpack.c.l.b16 %v97
    %v178 = vunpack.c.l.b16 %v98
    %v179 = vunpack.c.l.b16 %v99
    %v180 = vunpack.c.l.b16 %v100
    %v181 = vunpack.c.l.b16 %v101
    %v182 = vunpack.c.l.b16 %v102
    %v183 = vunpack.c.l.b16 %v103
    %v184 = vunpack.c.l.b16 %v104
    %v185 = vunpack.c.l.b16 %v105
    %v186 = vunpack.c.l.b16 %v106
    %v187 = vunpack.c.l.b16 %v107
    %v188 = vunpack.c.l.b16 %v108
    %v189 = vpack.c.b16 %v174, %v173
    %v190 = vpack.c.b16 %v176, %v175
    %v191 = vpack.c.b16 %v178, %v177
    %v192 = vpack.c.b16 %v180, %v179
    %v193 = vpack.c.b16 %v182, %v181
    %v194 = vpack.c.b16 %v184, %v183
    %v195 = vpack.c.b16 %v186, %v185
    %v196 = vpack.c.b16 %v188, %v187
    %205 = vmatprep.subr.bf16.mxu0 0
    %206 = vmatpush1.bf16.msra.mxu0 %v189
    %207 = vmatprep.subr.bf16.mxu0 0
    %208 = vmatpush1.bf16.msra.mxu0 %v190
    %209 = vmatprep.subr.bf16.mxu0 0
    %210 = vmatpush1.bf16.msra.mxu0 %v191
    %211 = vmatprep.subr.bf16.mxu0 0
    %212 = vmatpush1.bf16.msra.mxu0 %v192
    %213 = vmatprep.subr.bf16.mxu0 0
    %214 = vmatpush1.bf16.msra.mxu0 %v193
    %215 = vmatprep.subr.bf16.mxu0 0
    %216 = vmatpush1.bf16.msra.mxu0 %v194
    %217 = vmatprep.subr.bf16.mxu0 0
    %218 = vmatpush1.bf16.msra.mxu0 %v195
    %219 = vmatprep.subr.bf16.mxu0 0
    %220 = vmatpush1.bf16.msra.mxu0 %v196
    %221 = vmatprep.subr.bf16.mxu0 0
    %222 = vmatpush1.bf16.msra.mxu0 0
    %223 = vmatprep.subr.bf16.mxu0 0
    %224 = vmatpush1.bf16.msra.mxu0 0
    %225 = vmatprep.subr.bf16.mxu0 0
    %226 = vmatpush1.bf16.msra.mxu0 0
    %227 = vmatprep.subr.bf16.mxu0 0
    %228 = vmatpush1.bf16.msra.mxu0 0
    %229 = vmatprep.subr.bf16.mxu0 0
    %230 = vmatpush1.bf16.msra.mxu0 0
    %231 = vmatprep.subr.bf16.mxu0 0
    %232 = vmatpush1.bf16.msra.mxu0 0
    %233 = vmatprep.subr.bf16.mxu0 0
    %234 = vmatpush1.bf16.msra.mxu0 0
    %235 = vmatprep.subr.bf16.mxu0 0
    %236 = vmatpush1.bf16.msra.mxu0 0
    %237 = vmatprep.mubr.bf16.mxu0 0
    %238 = vmatmul.mubr.bf16.gmra.mrb[0].mxu0 %v141
    %v239 = vpop.f32.mrb[0].mxu0
    %v240 = vadd.f32 0.0, %v239
    %v241 = vpop.f32.mrb[0].mxu0
    %v242 = vpop.f32.mrb[0].mxu0
    %v243 = vadd.f32 0.0, %v242
    %v244 = vpop.f32.mrb[0].mxu0
    %245 = vmatprep.mubr.bf16.mxu0 0
    %246 = vmatmul.mubr.bf16.gmra.mrb[0].mxu0 %v142
    %v247 = vpop.f32.mrb[0].mxu0
    %v248 = vadd.f32 0.0, %v247
    %v249 = vpop.f32.mrb[0].mxu0
    %v250 = vpop.f32.mrb[0].mxu0
    %v251 = vadd.f32 0.0, %v250
    %v252 = vpop.f32.mrb[0].mxu0
    %253 = vmatprep.mubr.bf16.mxu0 0
    %254 = vmatmul.mubr.bf16.gmra.mrb[0].mxu0 %v143
    %v255 = vpop.f32.mrb[0].mxu0
    %v256 = vadd.f32 0.0, %v255
    %v257 = vpop.f32.mrb[0].mxu0
    %v258 = vpop.f32.mrb[0].mxu0
    %v259 = vadd.f32 0.0, %v258
    %v260 = vpop.f32.mrb[0].mxu0
    %261 = vmatprep.mubr.bf16.mxu0 0
    %262 = vmatmul.mubr.bf16.gmra.mrb[0].mxu0 %v144
    %v263 = vpop.f32.mrb[0].mxu0
    %v264 = vadd.f32 0.0, %v263
    %v265 = vpop.f32.mrb[0].mxu0
    %v266 = vpop.f32.mrb[0].mxu0
    %v267 = vadd.f32 0.0, %v266
    %v268 = vpop.f32.mrb[0].mxu0
    %269 = vmatprep.mubr.bf16.mxu0 0
    %270 = vmatmul.mubr.bf16.gmra.mrb[0].mxu0 %v145
    %v271 = vpop.f32.mrb[0].mxu0
    %v272 = vadd.f32 0.0, %v271
    %v273 = vpop.f32.mrb[0].mxu0
    %v274 = vpop.f32.mrb[0].mxu0
    %v275 = vadd.f32 0.0, %v274
    %v276 = vpop.f32.mrb[0].mxu0
    %277 = vmatprep.mubr.bf16.mxu0 0
    %278 = vmatmul.mubr.bf16.gmra.mrb[0].mxu0 %v146
    %v279 = vpop.f32.mrb[0].mxu0
    %v280 = vadd.f32 0.0, %v279
    %v281 = vpop.f32.mrb[0].mxu0
    %v282 = vpop.f32.mrb[0].mxu0
    %v283 = vadd.f32 0.0, %v282
    %v284 = vpop.f32.mrb[0].mxu0
    %285 = vmatprep.mubr.bf16.mxu0 0
    %286 = vmatmul.mubr.bf16.gmra.mrb[0].mxu0 %v147
    %v287 = vpop.f32.mrb[0].mxu0
    %v288 = vadd.f32 0.0, %v287
    %v289 = vpop.f32.mrb[0].mxu0
    %v290 = vpop.f32.mrb[0].mxu0
    %v291 = vadd.f32 0.0, %v290
    %v292 = vpop.f32.mrb[0].mxu0
    %293 = vmatprep.mubr.bf16.mxu0 0
    %294 = vmatmul.mubr.bf16.gmra.mrb[0].mxu0 %v148
    %v295 = vpop.f32.mrb[0].mxu0
    %v296 = vadd.f32 0.0, %v295
    %v297 = vpop.f32.mrb[0].mxu0
    %v298 = vpop.f32.mrb[0].mxu0
    %v299 = vadd.f32 0.0, %v298
    %v300 = vpop.f32.mrb[0].mxu0
    %301 = vdwg.mxu0
    %v302 = vadd.f32 %v61, %v240
    %v303 = vadd.f32 %v62, %v243
    %v304 = vadd.f32 %v63, %v248
    %v305 = vadd.f32 %v64, %v251
    %v306 = vadd.f32 %v65, %v256
    %v307 = vadd.f32 %v66, %v259
    %v308 = vadd.f32 %v67, %v264
    %v309 = vadd.f32 %v68, %v267
    %v310 = vadd.f32 %v69, %v272
    %v311 = vadd.f32 %v70, %v275
    %v312 = vadd.f32 %v71, %v280
    %v313 = vadd.f32 %v72, %v283
    %v314 = vadd.f32 %v73, %v288
    %v315 = vadd.f32 %v74, %v291
    %v316 = vadd.f32 %v75, %v296
    %v317 = vadd.f32 %v76, %v299
    %318 = vst [vmem:[#allocation7] sm:$0xff] %v302
    %319 = vst [vmem:[#allocation7 + $0x8] sm:$0xff] %v303
    %320 = vst [vmem:[#allocation7 + $0x10] sm:$0xff] %v304
    %321 = vst [vmem:[#allocation7 + $0x18] sm:$0xff] %v305
    %322 = vst [vmem:[#allocation7 + $0x20] sm:$0xff] %v306
    %323 = vst [vmem:[#allocation7 + $0x28] sm:$0xff] %v307
    %324 = vst [vmem:[#allocation7 + $0x30] sm:$0xff] %v308
    %325 = vst [vmem:[#allocation7 + $0x38] sm:$0xff] %v309
    %326 = vst [vmem:[#allocation7 + $0x40] sm:$0xff] %v310
    %327 = vst [vmem:[#allocation7 + $0x48] sm:$0xff] %v311
    %328 = vst [vmem:[#allocation7 + $0x50] sm:$0xff] %v312
    %329 = vst [vmem:[#allocation7 + $0x58] sm:$0xff] %v313
    %330 = vst [vmem:[#allocation7 + $0x60] sm:$0xff] %v314
    %331 = vst [vmem:[#allocation7 + $0x68] sm:$0xff] %v315
    %332 = vst [vmem:[#allocation7 + $0x70] sm:$0xff] %v316
    %333 = vst [vmem:[#allocation7 + $0x78] sm:$0xff] %v317
    // Predicated region
    $region22: #{tpu_custom_call.1} parent=1 // pred_check
      _
    $region23: #{tpu_custom_call.1} parent=1 // pred_check_branch
      %335 = sbr.rel (0) target = $region25
    $region24: #{tpu_custom_call.1} parent=1 // pred_region
      %s337 = ssub.s32 2048, 2048
      %338 = vsyncadd [#allocation4], %s337
      %s339 = sshll.u32 [#allocation7], 4
      %s340 = int_to_ptr.vmem [resolvable:$true] %s339
      %345 = dma.vmem_to_hbm [thread:$0]  %s340, 2048, %s2, [#allocation4], 128, 128, 8
    $region25: #{tpu_custom_call.1} parent=1 // pred_fallthru
      _
    // Predicated region
    $region26: #{tpu_custom_call.1} parent=1 // pred_check
      _
    $region27: #{tpu_custom_call.1} parent=1 // pred_check_branch
      %347 = sbr.rel (0) target = $region29
    $region28: #{tpu_custom_call.1} parent=1 // pred_region
      %348 = dma.done [#allocation4], 2048
    $region29: #{tpu_custom_call.1} parent=1 // pred_fallthru
      _
    %349 = vsyncpa [#allocation3], 1
    %350 = vsyncpa [#allocation6], 1
    %351 = vsyncpa [#allocation4], 1

</llo_original>
